<compile_context>
chip_gen: v5e
topology: v5e:2x2
jax: 0.10.0
libtpu: 0.0.40
codegen_flags: <defaults>
</compile_context>

<pallas_src>
import functools

import jax
import jax.numpy as jnp
from jax.experimental import pallas as pl
from jax.experimental.pallas import tpu as pltpu


def _round_up(x, m):
    return ((x + m - 1) // m) * m


# ----------------------------------------------------------------------------
# Pallas kernel: fused (critic | actor) MLP forward over one batch tile.
#   state_ref : [TB, S_pad]              (lanes beyond state_dim are zero)
#   w_ref     : [S_pad + 384, 128]       rows [0:S_pad]        -> layer-1 W
#                                        rows [S_pad:+128]     -> layer-2 W (blkdiag)
#                                        rows [S_pad+128:+128] -> layer-3 W (blkdiag)
#                                        rows [S_pad+256:+128] -> layer-4 W (blkdiag)
#   b_ref     : [8, 128]                 rows 0..3 = layer biases (zero-padded)
#   out_ref   : [TB, 128]                col 0 = value, cols 1..A = mu, rest 0
# ----------------------------------------------------------------------------
def _ppo_fused_kernel(state_ref, w_ref, b_ref, out_ref, *, s_pad):
    x = state_ref[...]

    w1 = w_ref[0:s_pad, :]
    w2 = w_ref[s_pad:s_pad + 128, :]
    w3 = w_ref[s_pad + 128:s_pad + 256, :]
    w4 = w_ref[s_pad + 256:s_pad + 384, :]

    h = jnp.tanh(jnp.dot(x, w1, preferred_element_type=jnp.float32) + b_ref[0:1, :])
    h = jnp.tanh(jnp.dot(h, w2, preferred_element_type=jnp.float32) + b_ref[1:2, :])
    h = jnp.tanh(jnp.dot(h, w3, preferred_element_type=jnp.float32) + b_ref[2:3, :])
    out_ref[...] = jnp.dot(h, w4, preferred_element_type=jnp.float32) + b_ref[3:4, :]


# ----------------------------------------------------------------------------
# Parameter construction (mirrors layer_init: orthogonal(std), bias = 0).
# Returns the "PyTorch-like" 17-tensor list (W transposed to [in, out]).
# ----------------------------------------------------------------------------
def init_ppo_params(key, state_dim, action_dim):
    sqrt2 = float(jnp.sqrt(2.0))
    critic_dims = [(state_dim, 64, sqrt2), (64, 16, sqrt2), (16, 32, sqrt2), (32, 1, 1.0)]
    actor_dims = [(state_dim, 64, sqrt2), (64, 16, sqrt2), (16, 32, sqrt2),
                  (32, action_dim, 0.01)]

    params = []
    keys = jax.random.split(key, len(critic_dims) + len(actor_dims))
    k_idx = 0
    for dims in (critic_dims, actor_dims):
        for (fan_in, fan_out, gain) in dims:
            w_oi = jax.nn.initializers.orthogonal(scale=gain)(
                keys[k_idx], (fan_out, fan_in), jnp.float32
            )
            k_idx += 1
            params.append(jnp.asarray(w_oi.T))                   # [in, out]
            params.append(jnp.zeros((1, fan_out), jnp.float32))  # bias [1, out]

    params.append(jnp.zeros((1, action_dim), jnp.float32))       # log_std
    return params


# ----------------------------------------------------------------------------
# Pack the 17 parameters into the fused slabs consumed by the kernel.
# ----------------------------------------------------------------------------
def pack_ppo_params(params, state_dim, action_dim):
    assert 1 + action_dim <= 128, "action_dim must fit in 127 lanes"
    (cw1, cb1, cw2, cb2, cw3, cb3, cw4, cb4,
     aw1, ab1, aw2, ab2, aw3, ab3, aw4, ab4, log_std) = params

    s_pad = _round_up(state_dim, 8)
    w = jnp.zeros((s_pad + 3 * 128, 128), jnp.float32)
    # layer 1: concat on output axis
    w = w.at[0:state_dim, 0:64].set(cw1)
    w = w.at[0:state_dim, 64:128].set(aw1)
    # layer 2: block diagonal [128 -> 32]
    o = s_pad
    w = w.at[o:o + 64, 0:16].set(cw2)
    w = w.at[o + 64:o + 128, 16:32].set(aw2)
    # layer 3: block diagonal [32 -> 64]
    o += 128
    w = w.at[o:o + 16, 0:32].set(cw3)
    w = w.at[o + 16:o + 32, 32:64].set(aw3)
    # layer 4: block diagonal [64 -> 1 + A]
    o += 128
    w = w.at[o:o + 32, 0:1].set(cw4)
    w = w.at[o + 32:o + 64, 1:1 + action_dim].set(aw4)

    b = jnp.zeros((8, 128), jnp.float32)
    b = b.at[0, 0:64].set(cb1[0]);  b = b.at[0, 64:128].set(ab1[0])
    b = b.at[1, 0:16].set(cb2[0]);  b = b.at[1, 16:32].set(ab2[0])
    b = b.at[2, 0:32].set(cb3[0]);  b = b.at[2, 32:64].set(ab3[0])
    b = b.at[3, 0:1].set(cb4[0]);   b = b.at[3, 1:1 + action_dim].set(ab4[0])

    return w, b, log_std


# ----------------------------------------------------------------------------
# Wrapper: one pallas_call with a parallel batch grid; weights stay resident.
# Returns (value [B,1], mu [B,A], std [1,A]) — the Normal(mu, std) parameters.
# ----------------------------------------------------------------------------
@jax.jit
def ppo_agent_forward(state, w_slab, b_slab, log_std):
    B, state_dim = state.shape
    action_dim = log_std.shape[1]
    s_pad = w_slab.shape[0] - 3 * 128

    # Batch tile: 8-aligned, capped at 256 rows (safe for v7x's 64 MiB VMEM).
    tb = 256 if B >= 256 else _round_up(B, 8)
    b_pad = _round_up(B, tb)

    state_p = jnp.pad(state, ((0, b_pad - B), (0, s_pad - state_dim)))

    kernel = functools.partial(_ppo_fused_kernel, s_pad=s_pad)

    packed = pl.pallas_call(
        kernel,
        out_shape=jax.ShapeDtypeStruct((b_pad, 128), jnp.float32),
        grid=(b_pad // tb,),
        in_specs=[
            pl.BlockSpec((tb, s_pad), lambda i: (i, 0)),
            pl.BlockSpec(w_slab.shape, lambda i: (0, 0)),   # resident weights
            pl.BlockSpec(b_slab.shape, lambda i: (0, 0)),   # resident biases
        ],
        out_specs=pl.BlockSpec((tb, 128), lambda i: (i, 0)),
        compiler_params=pltpu.CompilerParams(
            dimension_semantics=("parallel",)),
    )(state_p, w_slab, b_slab)

    value = packed[:B, 0:1]
    mu = packed[:B, 1:1 + action_dim]
    std = jnp.exp(log_std)  # parameter-only; no need to compute it in-kernel
    # TODO(synk): torch.distributions.Normal(mu, std) object itself has no
    # Pallas equivalent; we return its (loc, scale) parameters plus value.
    return value, mu, std


# ----------------------------------------------------------------------------
# Pure-JAX reference (unfused, original parameter layout) for sanity checking.
# ----------------------------------------------------------------------------
def ppo_agent_forward_ref(state, *params):
    def mlp(x, p):
        x = jnp.tanh(x @ p[0] + p[1])
        x = jnp.tanh(x @ p[2] + p[3])
        x = jnp.tanh(x @ p[4] + p[5])
        return x @ p[6] + p[7]

    critic_p = params[0:8]
    actor_p = params[8:16]
    log_std = params[16]
    return mlp(state, critic_p), mlp(state, actor_p), jnp.exp(log_std)


if __name__ == "__main__":
    B, STATE_DIM, ACTION_DIM = 8, 16, 4

    key = jax.random.PRNGKey(0)
    k_state, k_params = jax.random.split(key)

    state = jax.random.normal(k_state, (B, STATE_DIM), jnp.float32)
    params = init_ppo_params(k_params, STATE_DIM, ACTION_DIM)
    w_slab, b_slab, log_std = pack_ppo_params(params, STATE_DIM, ACTION_DIM)

    value, mu, std = ppo_agent_forward(state, w_slab, b_slab, log_std)
    jax.block_until_ready((value, mu, std))

    v_ref, mu_ref, std_ref = ppo_agent_forward_ref(state, *params)
    assert value.shape == (B, 1) and mu.shape == (B, ACTION_DIM) and std.shape == (1, ACTION_DIM)
    assert jnp.allclose(value, v_ref, atol=1e-5, rtol=1e-5)
    assert jnp.allclose(mu, mu_ref, atol=1e-5, rtol=1e-5)
    assert jnp.allclose(std, std_ref, atol=1e-6, rtol=1e-6)

    print("KERNEL_OK")
</pallas_src>

<mosaic_0001>
module attributes {stable_mosaic.version = 11 : i64} {
  func.func @_ppo_fused_kernel(%arg0: i32, %arg1: memref<8x16xf32, #tpu.memory_space<vmem>>, %arg2: memref<400x128xf32, #tpu.memory_space<vmem>>, %arg3: memref<8x128xf32, #tpu.memory_space<vmem>>, %arg4: memref<8x128xf32, #tpu.memory_space<vmem>>) attributes {dimension_semantics = [#tpu.dimension_semantics<parallel>], iteration_bounds = array<i64: 1>, scalar_prefetch = 0 : i64, scratch_operands = 0 : i64, tpu.core_type = #tpu.core_type<tc>, window_params = [{transform_indices = @transform_0, window_bounds = array<i64: 8, 16>}, {pipeline_mode = #tpu.pipeline_mode<synchronous>, transform_indices = @transform_1, window_bounds = array<i64: 400, 128>}, {pipeline_mode = #tpu.pipeline_mode<synchronous>, transform_indices = @transform_2, window_bounds = array<i64: 8, 128>}, {transform_indices = @transform_3, window_bounds = array<i64: 8, 128>}]} {
    %c0 = arith.constant 0 : index
    %c0_0 = arith.constant 0 : index
    %0 = vector.load %arg1[%c0, %c0_0] : memref<8x16xf32, #tpu.memory_space<vmem>>, vector<8x16xf32>
    %c0_1 = arith.constant 0 : index
    %c0_2 = arith.constant 0 : index
    %1 = vector.load %arg2[%c0_1, %c0_2] : memref<400x128xf32, #tpu.memory_space<vmem>>, vector<16x128xf32>
    %c16 = arith.constant 16 : index
    %c0_3 = arith.constant 0 : index
    %2 = vector.load %arg2[%c16, %c0_3] : memref<400x128xf32, #tpu.memory_space<vmem>>, vector<128x128xf32>
    %c144 = arith.constant 144 : index
    %c0_4 = arith.constant 0 : index
    %3 = vector.load %arg2[%c144, %c0_4] : memref<400x128xf32, #tpu.memory_space<vmem>>, vector<128x128xf32>
    %c272 = arith.constant 272 : index
    %c0_5 = arith.constant 0 : index
    %4 = vector.load %arg2[%c272, %c0_5] : memref<400x128xf32, #tpu.memory_space<vmem>>, vector<128x128xf32>
    %cst = arith.constant dense<0.000000e+00> : vector<8x128xf32>
    %5 = tpu.matmul %0, %1, %cst {dimension_numbers = #tpu.dot_dimension_numbers<[1], [0], [0], [1], [0, 0, 1, 1], [], []>} : vector<8x16xf32>, vector<16x128xf32>, vector<8x128xf32> -> vector<8x128xf32>
    %c0_6 = arith.constant 0 : index
    %c0_7 = arith.constant 0 : index
    %6 = vector.load %arg3[%c0_6, %c0_7] : memref<8x128xf32, #tpu.memory_space<vmem>>, vector<1x128xf32>
    %7 = vector.broadcast %6 : vector<1x128xf32> to vector<8x128xf32>
    %8 = arith.addf %5, %7 : vector<8x128xf32>
    %9 = math.tanh %8 : vector<8x128xf32>
    %cst_8 = arith.constant dense<0.000000e+00> : vector<8x128xf32>
    %10 = tpu.matmul %9, %2, %cst_8 {dimension_numbers = #tpu.dot_dimension_numbers<[1], [0], [0], [1], [0, 0, 1, 1], [], []>} : vector<8x128xf32>, vector<128x128xf32>, vector<8x128xf32> -> vector<8x128xf32>
    %c1 = arith.constant 1 : index
    %c0_9 = arith.constant 0 : index
    %11 = vector.load %arg3[%c1, %c0_9] : memref<8x128xf32, #tpu.memory_space<vmem>>, vector<1x128xf32>
    %12 = vector.broadcast %11 : vector<1x128xf32> to vector<8x128xf32>
    %13 = arith.addf %10, %12 : vector<8x128xf32>
    %14 = math.tanh %13 : vector<8x128xf32>
    %cst_10 = arith.constant dense<0.000000e+00> : vector<8x128xf32>
    %15 = tpu.matmul %14, %3, %cst_10 {dimension_numbers = #tpu.dot_dimension_numbers<[1], [0], [0], [1], [0, 0, 1, 1], [], []>} : vector<8x128xf32>, vector<128x128xf32>, vector<8x128xf32> -> vector<8x128xf32>
    %c2 = arith.constant 2 : index
    %c0_11 = arith.constant 0 : index
    %16 = vector.load %arg3[%c2, %c0_11] : memref<8x128xf32, #tpu.memory_space<vmem>>, vector<1x128xf32>
    %17 = vector.broadcast %16 : vector<1x128xf32> to vector<8x128xf32>
    %18 = arith.addf %15, %17 : vector<8x128xf32>
    %19 = math.tanh %18 : vector<8x128xf32>
    %cst_12 = arith.constant dense<0.000000e+00> : vector<8x128xf32>
    %20 = tpu.matmul %19, %4, %cst_12 {dimension_numbers = #tpu.dot_dimension_numbers<[1], [0], [0], [1], [0, 0, 1, 1], [], []>} : vector<8x128xf32>, vector<128x128xf32>, vector<8x128xf32> -> vector<8x128xf32>
    %c3 = arith.constant 3 : index
    %c0_13 = arith.constant 0 : index
    %21 = vector.load %arg3[%c3, %c0_13] : memref<8x128xf32, #tpu.memory_space<vmem>>, vector<1x128xf32>
    %22 = vector.broadcast %21 : vector<1x128xf32> to vector<8x128xf32>
    %23 = arith.addf %20, %22 : vector<8x128xf32>
    %c0_14 = arith.constant 0 : index
    %c0_15 = arith.constant 0 : index
    %24 = vector.load %arg4[%c0_14, %c0_15] : memref<8x128xf32, #tpu.memory_space<vmem>>, vector<8x128xf32>
    tpu.vector_store %arg4[%c0_14, %c0_15], %23 {strides = array<i32>} : memref<8x128xf32, #tpu.memory_space<vmem>>, vector<8x128xf32>,
    return
  }
  func.func @transform_0(%arg0: i32) -> (i32, i32) {
    %c0_i32 = arith.constant 0 : i32
    %c0_i32_0 = arith.constant 0 : i32
    return %arg0, %c0_i32 : i32, i32
  }
  func.func @transform_1(%arg0: i32) -> (i32, i32) {
    %c0_i32 = arith.constant 0 : i32
    %c0_i32_0 = arith.constant 0 : i32
    %c0_i32_1 = arith.constant 0 : i32
    return %c0_i32, %c0_i32_0 : i32, i32
  }
  func.func @transform_2(%arg0: i32) -> (i32, i32) {
    %c0_i32 = arith.constant 0 : i32
    %c0_i32_0 = arith.constant 0 : i32
    %c0_i32_1 = arith.constant 0 : i32
    return %c0_i32, %c0_i32_0 : i32, i32
  }
  func.func @transform_3(%arg0: i32) -> (i32, i32) {
    %c0_i32 = arith.constant 0 : i32
    %c0_i32_0 = arith.constant 0 : i32
    return %arg0, %c0_i32 : i32, i32
  }
}

</mosaic_0001>

<llo_original>
// kernel: ppo_agent_forward.1
$region0: #{ppo_agent_forward.1}
  #allocation0 [shape = 'u32[]', space=smem, size = 0x4, offset = 0x4, fixed_abs, tag = 'smem constant byte address 0x4 - core index']
  #allocation1 [shape = 'u32[72,128]{1,0:T(1,128)}', space=vmem, size = 0x9000, scoped, tag = 'internal scratch']
  %s0 = inlined_call_operand.hbm [shape: f32[8,16], index: 0, kind: input, shape index: {}]
  %s1 = inlined_call_operand.hbm [shape: f32[400,128], index: 1, kind: input, shape index: {}]
  %s2 = inlined_call_operand.hbm [shape: f32[8,128], index: 2, kind: input, shape index: {}]
  %s3 = inlined_call_operand.vmem [shape: f32[8,128], index: 3, kind: output, shape index: {}]
  %s4 = sld [smem:[#allocation0]]
  $region34: #{ppo_agent_forward.1} parent=0
    _
  %s6 = ssub.s32 1, %s4
  %s7 = scalar_select 0, %s6, %s4
  $region1: #{ppo_agent_forward.1} parent=0
    #allocation2 [shape = 'u8[4096]{0}', space=vmem, size = 0x1000, scoped, tag = 'input window, operand 0, single buffered']
    #allocation3 [shape = 's32[1]{0}', space=sflag, size = 0x4, scoped, tag = 'scoped memory for ppo_agent_forward.1']
    #allocation4 [shape = 'u8[204800]{0}', space=vmem, size = 0x32000, scoped, tag = 'input window, operand 1, single buffered']
    #allocation5 [shape = 's32[1]{0}', space=sflag, size = 0x4, scoped, tag = 'scoped memory for ppo_agent_forward.1']
    #allocation6 [shape = 'u8[4096]{0}', space=vmem, size = 0x1000, scoped, tag = 'input window, operand 2, single buffered']
    %8 = vsyncpa [#allocation3], 0
    %9 = vsyncpa [#allocation5], 0
    // Predicated region
    $region2: #{ppo_agent_forward.1} parent=1 // pred_check
      _
    $region3: #{ppo_agent_forward.1} parent=1 // pred_check_branch
      %11 = sbr.rel (0) target = $region5
    $region4: #{ppo_agent_forward.1} parent=1 // pred_region
      %13 = vsyncadd [#allocation3], 0
      %s15 = sshll.u32 %s0, 4
      %s16 = int_to_ptr.hbm [resolvable:$true] %s15
      %s17 = sshll.u32 [#allocation2], 4
      %s18 = int_to_ptr.vmem [resolvable:$true] %s17
      %20 = dma.hbm_to_vmem [thread:$0]  %s16, 128, %s18, [#allocation3]
    $region5: #{ppo_agent_forward.1} parent=1 // pred_fallthru
      _
    // Predicated region
    $region6: #{ppo_agent_forward.1} parent=1 // pred_check
      _
    $region7: #{ppo_agent_forward.1} parent=1 // pred_check_branch
      %22 = sbr.rel (0) target = $region9
    $region8: #{ppo_agent_forward.1} parent=1 // pred_region
      %24 = vsyncadd [#allocation5], 0
      %s25 = sshll.u32 %s1, 4
      %s26 = int_to_ptr.hbm [resolvable:$true] %s25
      %s27 = sshll.u32 [#allocation4], 4
      %s28 = int_to_ptr.vmem [resolvable:$true] %s27
      %33 = dma.hbm_to_vmem [thread:$0]  %s26, 6400, %s28, [#allocation5], 128, 128, 8
    $region9: #{ppo_agent_forward.1} parent=1 // pred_fallthru
      _
    // Predicated region
    $region10: #{ppo_agent_forward.1} parent=1 // pred_check
      _
    $region11: #{ppo_agent_forward.1} parent=1 // pred_check_branch
      %35 = sbr.rel (0) target = $region13
    $region12: #{ppo_agent_forward.1} parent=1 // pred_region
      %37 = vsyncadd [#allocation5], 0
      %s39 = sshll.u32 %s2, 4
      %s40 = int_to_ptr.hbm [resolvable:$true] %s39
      %s41 = sshll.u32 [#allocation6], 4
      %s42 = int_to_ptr.vmem [resolvable:$true] %s41
      %44 = dma.hbm_to_vmem [thread:$0]  %s40, 128, %s42, [#allocation5]
    $region13: #{ppo_agent_forward.1} parent=1 // pred_fallthru
      _
    // Predicated region
    $region14: #{ppo_agent_forward.1} parent=1 // pred_check
      _
    $region15: #{ppo_agent_forward.1} parent=1 // pred_check_branch
      %46 = sbr.rel (0) target = $region17
    $region16: #{ppo_agent_forward.1} parent=1 // pred_region
      %48 = dma.done [#allocation3], 128
    $region17: #{ppo_agent_forward.1} parent=1 // pred_fallthru
      _
    // Predicated region
    $region18: #{ppo_agent_forward.1} parent=1 // pred_check
      _
    $region19: #{ppo_agent_forward.1} parent=1 // pred_check_branch
      %50 = sbr.rel (0) target = $region21
    $region20: #{ppo_agent_forward.1} parent=1 // pred_region
      %52 = dma.done [#allocation5], 6400
    $region21: #{ppo_agent_forward.1} parent=1 // pred_fallthru
      _
    // Predicated region
    $region22: #{ppo_agent_forward.1} parent=1 // pred_check
      _
    $region23: #{ppo_agent_forward.1} parent=1 // pred_check_branch
      %54 = sbr.rel (0) target = $region25
    $region24: #{ppo_agent_forward.1} parent=1 // pred_region
      %56 = dma.done [#allocation5], 128
    $region25: #{ppo_agent_forward.1} parent=1 // pred_fallthru
      _
    %v57 = vld [vmem:[#allocation2] sm:$0xff]
    %v58 = vld [vmem:[#allocation4] sm:$0xff]
    %v59 = vld [vmem:[#allocation4 + $0x8] sm:$0xff]
    %v60 = vld [vmem:[#allocation4 + $0x10] sm:$0xff]
    %v61 = vld [vmem:[#allocation4 + $0x18] sm:$0xff]
    %v62 = vld [vmem:[#allocation4 + $0x20] sm:$0xff]
    %v63 = vld [vmem:[#allocation4 + $0x28] sm:$0xff]
    %v64 = vld [vmem:[#allocation4 + $0x30] sm:$0xff]
    %v65 = vld [vmem:[#allocation4 + $0x38] sm:$0xff]
    %v66 = vld [vmem:[#allocation4 + $0x40] sm:$0xff]
    %v67 = vld [vmem:[#allocation4 + $0x48] sm:$0xff]
    %v68 = vld [vmem:[#allocation4 + $0x50] sm:$0xff]
    %v69 = vld [vmem:[#allocation4 + $0x58] sm:$0xff]
    %v70 = vld [vmem:[#allocation4 + $0x60] sm:$0xff]
    %v71 = vld [vmem:[#allocation4 + $0x68] sm:$0xff]
    %v72 = vld [vmem:[#allocation4 + $0x70] sm:$0xff]
    %v73 = vld [vmem:[#allocation4 + $0x78] sm:$0xff]
    %v74 = vld [vmem:[#allocation4 + $0x80] sm:$0xff]
    %v75 = vld [vmem:[#allocation4 + $0x88] sm:$0xff]
    %v76 = vld [vmem:[#allocation4 + $0x90] sm:$0xff]
    %v77 = vld [vmem:[#allocation4 + $0x98] sm:$0xff]
    %v78 = vld [vmem:[#allocation4 + $0xa0] sm:$0xff]
    %v79 = vld [vmem:[#allocation4 + $0xa8] sm:$0xff]
    %v80 = vld [vmem:[#allocation4 + $0xb0] sm:$0xff]
    %v81 = vld [vmem:[#allocation4 + $0xb8] sm:$0xff]
    %v82 = vld [vmem:[#allocation4 + $0xc0] sm:$0xff]
    %v83 = vld [vmem:[#allocation4 + $0xc8] sm:$0xff]
    %v84 = vld [vmem:[#allocation4 + $0xd0] sm:$0xff]
    %v85 = vld [vmem:[#allocation4 + $0xd8] sm:$0xff]
    %v86 = vld [vmem:[#allocation4 + $0xe0] sm:$0xff]
    %v87 = vld [vmem:[#allocation4 + $0xe8] sm:$0xff]
    %v88 = vld [vmem:[#allocation4 + $0xf0] sm:$0xff]
    %v89 = vld [vmem:[#allocation4 + $0xf8] sm:$0xff]
    %v90 = vld [vmem:[#allocation4 + $0x100] sm:$0xff]
    %v91 = vld [vmem:[#allocation4 + $0x108] sm:$0xff]
    %v92 = vld [vmem:[#allocation4 + $0x110] sm:$0xff]
    %v93 = vld [vmem:[#allocation4 + $0x118] sm:$0xff]
    %v94 = vld [vmem:[#allocation4 + $0x120] sm:$0xff]
    %v95 = vld [vmem:[#allocation4 + $0x128] sm:$0xff]
    %v96 = vld [vmem:[#allocation4 + $0x130] sm:$0xff]
    %v97 = vld [vmem:[#allocation4 + $0x138] sm:$0xff]
    %v98 = vld [vmem:[#allocation4 + $0x140] sm:$0xff]
    %v99 = vld [vmem:[#allocation4 + $0x148] sm:$0xff]
    %v100 = vld [vmem:[#allocation4 + $0x150] sm:$0xff]
    %v101 = vld [vmem:[#allocation4 + $0x158] sm:$0xff]
    %v102 = vld [vmem:[#allocation4 + $0x160] sm:$0xff]
    %v103 = vld [vmem:[#allocation4 + $0x168] sm:$0xff]
    %v104 = vld [vmem:[#allocation4 + $0x170] sm:$0xff]
    %v105 = vld [vmem:[#allocation4 + $0x178] sm:$0xff]
    %v106 = vld [vmem:[#allocation4 + $0x180] sm:$0xff]
    %v107 = vld [vmem:[#allocation4 + $0x188] sm:$0xff]
    %v108 = vld [vmem:[#allocation6] sm:$0x1]
    %v109 = vperm.slane %v108, 0
    %vm110 = vcmask 130048
    %v112 = vsel %vm110, %v57, 0
    %114 = vmatpush.msra.mxu0 0.0
    %115 = vmatpush.msra.mxu0 0.0
    %116 = vmatpush.msra.mxu0 0.0
    %117 = vmatpush.msra.mxu0 0.0
    %118 = vmatpush.msra.mxu0 0.0
    %119 = vmatpush.msra.mxu0 0.0
    %120 = vmatpush.msra.mxu0 0.0
    %121 = vmatpush.msra.mxu0 0.0
    %122 = vmatpush.msra.mxu0 0.0
    %123 = vmatpush.msra.mxu0 0.0
    %124 = vmatpush.msra.mxu0 0.0
    %125 = vmatpush.msra.mxu0 0.0
    %126 = vmatpush.msra.mxu0 0.0
    %127 = vmatpush.msra.mxu0 0.0
    %128 = vmatpush.msra.mxu0 %v59
    %129 = vmatpush.msra.mxu0 %v58
    %130 = vmatmul.f32.gmra.mxu0 %v112
    %v131 = vpop.f32.mrf.mxu0
    %v132 = vadd.f32 %v109, %v131
    %133 = vdwg.mxu0
    %v134 = vtanh.pop %v132
    %v135 = vld [vmem:[#allocation6 + $0x1] sm:$0x1]
    %v136 = vperm.slane %v135, 0
    %137 = vmatpush.msra.mxu0 %v75
    %138 = vmatpush.msra.mxu0 %v74
    %139 = vmatpush.msra.mxu0 %v73
    %140 = vmatpush.msra.mxu0 %v72
    %141 = vmatpush.msra.mxu0 %v71
    %142 = vmatpush.msra.mxu0 %v70
    %143 = vmatpush.msra.mxu0 %v69
    %144 = vmatpush.msra.mxu0 %v68
    %145 = vmatpush.msra.mxu0 %v67
    %146 = vmatpush.msra.mxu0 %v66
    %147 = vmatpush.msra.mxu0 %v65
    %148 = vmatpush.msra.mxu0 %v64
    %149 = vmatpush.msra.mxu0 %v63
    %150 = vmatpush.msra.mxu0 %v62
    %151 = vmatpush.msra.mxu0 %v61
    %152 = vmatpush.msra.mxu0 %v60
    %153 = vmatmul.f32.gmra.mxu0 %v134
    %v154 = vpop.f32.mrf.mxu0
    %v155 = vadd.f32 %v136, %v154
    %156 = vdwg.mxu0
    %v157 = vtanh.pop %v155
    %v158 = vld [vmem:[#allocation6 + $0x2] sm:$0x1]
    %v159 = vperm.slane %v158, 0
    %160 = vmatpush.msra.mxu0 %v91
    %161 = vmatpush.msra.mxu0 %v90
    %162 = vmatpush.msra.mxu0 %v89
    %163 = vmatpush.msra.mxu0 %v88
    %164 = vmatpush.msra.mxu0 %v87
    %165 = vmatpush.msra.mxu0 %v86
    %166 = vmatpush.msra.mxu0 %v85
    %167 = vmatpush.msra.mxu0 %v84
    %168 = vmatpush.msra.mxu0 %v83
    %169 = vmatpush.msra.mxu0 %v82
    %170 = vmatpush.msra.mxu0 %v81
    %171 = vmatpush.msra.mxu0 %v80
    %172 = vmatpush.msra.mxu0 %v79
    %173 = vmatpush.msra.mxu0 %v78
    %174 = vmatpush.msra.mxu0 %v77
    %175 = vmatpush.msra.mxu0 %v76
    %176 = vmatmul.f32.gmra.mxu0 %v157
    %v177 = vpop.f32.mrf.mxu0
    %v178 = vadd.f32 %v159, %v177
    %179 = vdwg.mxu0
    %v180 = vtanh.pop %v178
    %v181 = vld [vmem:[#allocation6 + $0x3] sm:$0x1]
    %v182 = vperm.slane %v181, 0
    %183 = vmatpush.msra.mxu0 %v107
    %184 = vmatpush.msra.mxu0 %v106
    %185 = vmatpush.msra.mxu0 %v105
    %186 = vmatpush.msra.mxu0 %v104
    %187 = vmatpush.msra.mxu0 %v103
    %188 = vmatpush.msra.mxu0 %v102
    %189 = vmatpush.msra.mxu0 %v101
    %190 = vmatpush.msra.mxu0 %v100
    %191 = vmatpush.msra.mxu0 %v99
    %192 = vmatpush.msra.mxu0 %v98
    %193 = vmatpush.msra.mxu0 %v97
    %194 = vmatpush.msra.mxu0 %v96
    %195 = vmatpush.msra.mxu0 %v95
    %196 = vmatpush.msra.mxu0 %v94
    %197 = vmatpush.msra.mxu0 %v93
    %198 = vmatpush.msra.mxu0 %v92
    %199 = vmatmul.f32.gmra.mxu0 %v180
    %v200 = vpop.f32.mrf.mxu0
    %v201 = vadd.f32 %v182, %v200
    %202 = vdwg.mxu0
    %203 = vst [vmem:[%s3] sm:$0xff] %v201
    // Predicated region
    $region26: #{ppo_agent_forward.1} parent=1 // pred_check
      _
    $region27: #{ppo_agent_forward.1} parent=1 // pred_check_branch
      %205 = sbr.rel (0) target = $region29
    $region28: #{ppo_agent_forward.1} parent=1 // pred_region
      _
    $region29: #{ppo_agent_forward.1} parent=1 // pred_fallthru
      _
    // Predicated region
    $region30: #{ppo_agent_forward.1} parent=1 // pred_check
      _
    $region31: #{ppo_agent_forward.1} parent=1 // pred_check_branch
      %207 = sbr.rel (0) target = $region33
    $region32: #{ppo_agent_forward.1} parent=1 // pred_region
      _
    $region33: #{ppo_agent_forward.1} parent=1 // pred_fallthru
      _
    %208 = vsyncpa [#allocation3], 1
    %209 = vsyncpa [#allocation5], 1

</llo_original>
